<compile_context>
chip_gen: v6e
topology: v6e:2x2x1
jax: 0.10.0
libtpu: 0.0.40
codegen_flags: <defaults>
</compile_context>

<pallas_src>
import functools

import jax
import jax.numpy as jnp
from jax.experimental import pallas as pl
from jax.experimental.pallas import tpu as pltpu

LRELU_SLOPE = 0.2
BN_EPS = 1e-5
_VMEM_LIMIT = 32 * 1024 * 1024  # explicit; > v5e's 16 MiB default scoped, <= v7x physical


def _round_up(x, m):
    return (x + m - 1) // m * m


def _m_tiling(m):
    """Fixed tile size for the M (rows) axis + padded M."""
    tm = 512 if m >= 512 else _round_up(m, 8)
    return tm, _round_up(m, tm)


# ----------------------------------------------------------------------------
# Pallas kernels
# ----------------------------------------------------------------------------
def _conv_bias_lrelu_kernel(p_ref, w_ref, b_ref, o_ref):
    """One M-tile: out = LeakyReLU(patches @ weight + bias). Lane-dense (Cpad) output."""
    acc = jnp.dot(p_ref[...], w_ref[...], preferred_element_type=jnp.float32)
    acc = acc + b_ref[...]
    o_ref[...] = jnp.where(acc > 0, acc, LRELU_SLOPE * acc)


def _conv_bn_lrelu_kernel(p_ref, w_ref, g_ref, b_ref, o_ref, sum_ref, sq_ref, *, inv_m):
    """Fused Conv (im2col GEMM, bias-free) + BatchNorm3d (batch stats) + LeakyReLU(0.2).

    grid = (2, num_m_tiles). Pass p==0 accumulates per-channel sum / sum-of-squares over
    all M tiles into VMEM scratch; pass p==1 recomputes the tile GEMM and writes the
    normalized + activated output. Zero-padded M rows contribute 0 to both sums, so the
    statistics use the true 1/M (inv_m) and match BatchNorm3d's biased batch variance.
    """
    p = pl.program_id(0)
    i = pl.program_id(1)
    acc = jnp.dot(p_ref[...], w_ref[...], preferred_element_type=jnp.float32)

    @pl.when((p == 0) & (i == 0))
    def _():
        sum_ref[...] = jnp.zeros_like(sum_ref)
        sq_ref[...] = jnp.zeros_like(sq_ref)

    @pl.when(p == 0)
    def _():
        sum_ref[...] += jnp.sum(acc, axis=0, keepdims=True)
        sq_ref[...] += jnp.sum(acc * acc, axis=0, keepdims=True)
        o_ref[...] = acc  # placeholder write; overwritten in pass 1

    @pl.when(p == 1)
    def _():
        mean = sum_ref[...] * inv_m
        var = jnp.maximum(sq_ref[...] * inv_m - mean * mean, 0.0)
        y = (acc - mean) * jax.lax.rsqrt(var + BN_EPS) * g_ref[...] + b_ref[...]
        o_ref[...] = jnp.where(y > 0, y, LRELU_SLOPE * y)


# ----------------------------------------------------------------------------
# Glue: channel-last im2col, weight prep, per-layer Pallas invocation
# ----------------------------------------------------------------------------
def im2col_3d(x, k, stride, pad):
    """x: (N, D, H, W, C) channel-last -> patches (M, K), K ordered (kd, kh, kw, C)."""
    N, D, H, W, C = x.shape
    xp = jnp.pad(x, ((0, 0), (pad, pad), (pad, pad), (pad, pad), (0, 0)))
    Do = (D + 2 * pad - k) // stride + 1
    Ho = (H + 2 * pad - k) // stride + 1
    Wo = (W + 2 * pad - k) // stride + 1
    cols = []
    for kd in range(k):
        for kh in range(k):
            for kw in range(k):
                cols.append(xp[:,
                               kd:kd + stride * (Do - 1) + 1:stride,
                               kh:kh + stride * (Ho - 1) + 1:stride,
                               kw:kw + stride * (Wo - 1) + 1:stride, :])
    patches = jnp.concatenate(cols, axis=-1)               # (N, Do, Ho, Wo, k^3*C)
    M = N * Do * Ho * Wo
    return patches.reshape(M, k * k * k * C), (N, Do, Ho, Wo)


def _prep_weight(w, cpad):
    """PyTorch (Cout, Cin, kd, kh, kw) -> [K, Cpad] bf16 with K ordered (kd, kh, kw, Cin)."""
    cout = w.shape[0]
    w_kc = jnp.transpose(w, (2, 3, 4, 1, 0)).reshape(-1, cout)
    w_kc = jnp.pad(w_kc, ((0, 0), (0, cpad - cout)))
    return w_kc.astype(jnp.bfloat16)


def _pad_vec(v, cpad):
    return jnp.pad(v, (0, cpad - v.shape[0])).reshape(1, cpad).astype(jnp.float32)


def conv3d_layer(x_cl, layer):
    """x_cl: (N, D, H, W, Cin) f32 channel-last -> post-activation (N, Do, Ho, Wo, Cout)."""
    w = layer["w"]
    cout, k = w.shape[0], w.shape[2]
    cpad = _round_up(cout, 128)
    stride = layer["stride"]

    patches, (N, Do, Ho, Wo) = im2col_3d(x_cl.astype(jnp.bfloat16), k, stride, 1)
    M, K = patches.shape
    tm, m_pad = _m_tiling(M)
    if m_pad != M:
        patches = jnp.pad(patches, ((0, m_pad - M), (0, 0)))
    n_m = m_pad // tm
    w_kc = _prep_weight(w, cpad)

    if layer["kind"] == "conv_lrelu":
        bias = _pad_vec(layer["b"], cpad)
        out = pl.pallas_call(
            _conv_bias_lrelu_kernel,
            out_shape=jax.ShapeDtypeStruct((m_pad, cpad), jnp.float32),
            grid_spec=pltpu.PrefetchScalarGridSpec(
                num_scalar_prefetch=0,
                grid=(n_m,),
                in_specs=[
                    pl.BlockSpec((tm, K), lambda i: (i, 0)),
                    pl.BlockSpec((K, cpad), lambda i: (0, 0)),
                    pl.BlockSpec((1, cpad), lambda i: (0, 0)),
                ],
                out_specs=pl.BlockSpec((tm, cpad), lambda i: (i, 0)),
            ),
            compiler_params=pltpu.CompilerParams(
                dimension_semantics=("parallel",),
                vmem_limit_bytes=_VMEM_LIMIT,
            ),
        )(patches, w_kc, bias)
    else:
        gamma = _pad_vec(layer["gamma"], cpad)
        beta = _pad_vec(layer["beta"], cpad)
        out = pl.pallas_call(
            functools.partial(_conv_bn_lrelu_kernel, inv_m=1.0 / M),
            out_shape=jax.ShapeDtypeStruct((m_pad, cpad), jnp.float32),
            grid_spec=pltpu.PrefetchScalarGridSpec(
                num_scalar_prefetch=0,
                grid=(2, n_m),                      # pass axis outer, M tiles inner
                in_specs=[
                    pl.BlockSpec((tm, K), lambda p, i: (i, 0)),
                    pl.BlockSpec((K, cpad), lambda p, i: (0, 0)),
                    pl.BlockSpec((1, cpad), lambda p, i: (0, 0)),
                    pl.BlockSpec((1, cpad), lambda p, i: (0, 0)),
                ],
                out_specs=pl.BlockSpec((tm, cpad), lambda p, i: (i, 0)),
                scratch_shapes=[
                    pltpu.VMEM((1, cpad), jnp.float32),   # per-channel sum
                    pltpu.VMEM((1, cpad), jnp.float32),   # per-channel sum of squares
                ],
            ),
            compiler_params=pltpu.CompilerParams(
                dimension_semantics=("arbitrary", "arbitrary"),
                vmem_limit_bytes=_VMEM_LIMIT,
            ),
        )(patches, w_kc, gamma, beta)

    # Drop padded rows / padded channels; [M, Cout] IS the flattened NDHWC activation.
    return out[:M, :cout].reshape(N, Do, Ho, Wo, cout)


# ----------------------------------------------------------------------------
# Parameters + forward
# ----------------------------------------------------------------------------
def init_params(key, nc, ndf, n_layers=3):
    """Deterministic parameter init matching the PyTorch module's layer shapes."""
    layers = []
    key, kw = jax.random.split(key)
    fan_in = nc * 4 * 4 * 4
    layers.append(dict(
        kind="conv_lrelu", stride=2,
        w=jax.random.normal(kw, (ndf, nc, 4, 4, 4), jnp.float32) * (2.0 / fan_in) ** 0.5,
        b=jnp.zeros((ndf,), jnp.float32),
    ))
    mult = 1
    for n in range(1, n_layers):
        mult_prev, mult = mult, min(2 ** n, 8)
        cin, cout = ndf * mult_prev, ndf * mult
        key, kw = jax.random.split(key)
        fan_in = cin * 4 * 4 * 4
        layers.append(dict(
            kind="conv_bn_lrelu", stride=2,
            w=jax.random.normal(kw, (cout, cin, 4, 4, 4), jnp.float32) * (2.0 / fan_in) ** 0.5,
            gamma=jnp.ones((cout,), jnp.float32),
            beta=jnp.zeros((cout,), jnp.float32),
        ))
    mult_prev, mult = mult, min(2 ** n_layers, 8)
    cin, cout = ndf * mult_prev, ndf * mult
    key, kw = jax.random.split(key)
    fan_in = cin * 4 * 4 * 4
    layers.append(dict(
        kind="conv_bn_lrelu", stride=1,
        w=jax.random.normal(kw, (cout, cin, 4, 4, 4), jnp.float32) * (2.0 / fan_in) ** 0.5,
        gamma=jnp.ones((cout,), jnp.float32),
        beta=jnp.zeros((cout,), jnp.float32),
    ))
    return layers


def feature_extractor_forward(params, x_ncdhw):
    """act_only=True path: returns (NCDHW activations, channel-last activations)."""
    x = jnp.transpose(x_ncdhw, (0, 2, 3, 4, 1))            # one-time NCDHW -> NDHWC
    acts_cl = []
    for layer in params:
        x = conv3d_layer(x, layer)
        acts_cl.append(x)
    acts = [jnp.transpose(a, (0, 4, 1, 2, 3)) for a in acts_cl]
    return acts, acts_cl


# ----------------------------------------------------------------------------
# Pure-XLA reference (matched precision: bf16 conv inputs, f32 accumulation)
# ----------------------------------------------------------------------------
def _ref_layer(x_cl, layer):
    w = layer["w"]
    cout = w.shape[0]
    stride = layer["stride"]
    w_dhwio = jnp.transpose(w, (2, 3, 4, 1, 0)).astype(jnp.bfloat16)
    y = jax.lax.conv_general_dilated(
        x_cl.astype(jnp.bfloat16), w_dhwio,
        window_strides=(stride,) * 3, padding=[(1, 1)] * 3,
        dimension_numbers=("NDHWC", "DHWIO", "NDHWC"),
        preferred_element_type=jnp.float32)
    if layer["kind"] == "conv_lrelu":
        y = y + layer["b"].reshape(1, 1, 1, 1, cout)
    else:
        m = y.shape[0] * y.shape[1] * y.shape[2] * y.shape[3]
        yf = y.reshape(m, cout)
        mean = jnp.sum(yf, axis=0, keepdims=True) / m
        var = jnp.maximum(jnp.sum(yf * yf, axis=0, keepdims=True) / m - mean * mean, 0.0)
        yf = (yf - mean) * jax.lax.rsqrt(var + BN_EPS) * layer["gamma"].reshape(1, cout) \
             + layer["beta"].reshape(1, cout)
        y = yf.reshape(y.shape)
    return jnp.where(y > 0, y, LRELU_SLOPE * y)


if __name__ == "__main__":
    key = jax.random.PRNGKey(0)
    kx, kp = jax.random.split(key)

    # Small shapes consistent with the module: batch=2, nc=3, ndf=8, 16^3 volume.
    N, NC, NDF, S = 2, 3, 8, 16
    x = jax.random.normal(kx, (N, NC, S, S, S), jnp.float32)
    params = init_params(kp, NC, NDF, n_layers=3)

    acts, acts_cl = feature_extractor_forward(params, x)
    acts = jax.block_until_ready(acts)

    expected = [(N, 8, 8, 8, 8), (N, 16, 4, 4, 4), (N, 32, 2, 2, 2), (N, 64, 1, 1, 1)]
    assert [a.shape for a in acts] == expected, [a.shape for a in acts]
    assert all(bool(jnp.all(jnp.isfinite(a))) for a in acts)

    # Per-layer cross-check against an XLA conv/BN reference at matched (bf16-in, f32-acc)
    # precision, feeding each reference layer the kernel path's actual input.
    x_cl = jnp.transpose(x, (0, 2, 3, 4, 1))
    for i, layer in enumerate(params):
        ref = _ref_layer(x_cl, layer)
        err = float(jnp.max(jnp.abs(ref - acts_cl[i])))
        assert err < 5e-2, (i, err)
        x_cl = acts_cl[i]

    print("KERNEL_OK")
</pallas_src>

<mosaic_0001>
module attributes {stable_mosaic.version = 11 : i64} {
  func.func @_conv_bias_lrelu_kernel(%arg0: i32, %arg1: memref<512x192xbf16, #tpu.memory_space<vmem>>, %arg2: memref<192x128xbf16, #tpu.memory_space<vmem>>, %arg3: memref<1x128xf32, #tpu.memory_space<vmem>>, %arg4: memref<512x128xf32, #tpu.memory_space<vmem>>) attributes {dimension_semantics = [#tpu.dimension_semantics<parallel>], iteration_bounds = array<i64: 2>, scalar_prefetch = 0 : i64, scratch_operands = 0 : i64, tpu.core_type = #tpu.core_type<tc>, window_params = [{transform_indices = @transform_0, window_bounds = array<i64: 512, 192>}, {pipeline_mode = #tpu.pipeline_mode<synchronous>, transform_indices = @transform_1, window_bounds = array<i64: 192, 128>}, {pipeline_mode = #tpu.pipeline_mode<synchronous>, transform_indices = @transform_2, window_bounds = array<i64: 1, 128>}, {transform_indices = @transform_3, window_bounds = array<i64: 512, 128>}]} {
    %c0 = arith.constant 0 : index
    %c0_0 = arith.constant 0 : index
    %0 = vector.load %arg1[%c0, %c0_0] : memref<512x192xbf16, #tpu.memory_space<vmem>>, vector<512x192xbf16>
    %c0_1 = arith.constant 0 : index
    %c0_2 = arith.constant 0 : index
    %1 = vector.load %arg2[%c0_1, %c0_2] : memref<192x128xbf16, #tpu.memory_space<vmem>>, vector<192x128xbf16>
    %cst = arith.constant dense<0.000000e+00> : vector<512x128xf32>
    %2 = tpu.matmul %0, %1, %cst {dimension_numbers = #tpu.dot_dimension_numbers<[1], [0], [0], [1], [0, 0, 1, 1], [], []>} : vector<512x192xbf16>, vector<192x128xbf16>, vector<512x128xf32> -> vector<512x128xf32>
    %c0_3 = arith.constant 0 : index
    %c0_4 = arith.constant 0 : index
    %3 = vector.load %arg3[%c0_3, %c0_4] : memref<1x128xf32, #tpu.memory_space<vmem>>, vector<1x128xf32>
    %4 = vector.broadcast %3 : vector<1x128xf32> to vector<512x128xf32>
    %5 = arith.addf %2, %4 : vector<512x128xf32>
    %cst_5 = arith.constant 0.000000e+00 : f32
    %6 = vector.broadcast %cst_5 : f32 to vector<512x128xf32>
    %7 = arith.cmpf ogt, %5, %6 : vector<512x128xf32>
    %cst_6 = arith.constant 2.000000e-01 : f32
    %8 = vector.broadcast %cst_6 : f32 to vector<512x128xf32>
    %9 = arith.mulf %8, %5 : vector<512x128xf32>
    %10 = arith.select %7, %5, %9 : vector<512x128xi1>, vector<512x128xf32>
    %c0_7 = arith.constant 0 : index
    %c0_8 = arith.constant 0 : index
    %11 = vector.load %arg4[%c0_7, %c0_8] : memref<512x128xf32, #tpu.memory_space<vmem>>, vector<512x128xf32>
    tpu.vector_store %arg4[%c0_7, %c0_8], %10 {strides = array<i32>} : memref<512x128xf32, #tpu.memory_space<vmem>>, vector<512x128xf32>,
    return
  }
  func.func @transform_0(%arg0: i32) -> (i32, i32) {
    %c0_i32 = arith.constant 0 : i32
    %c0_i32_0 = arith.constant 0 : i32
    return %arg0, %c0_i32 : i32, i32
  }
  func.func @transform_1(%arg0: i32) -> (i32, i32) {
    %c0_i32 = arith.constant 0 : i32
    %c0_i32_0 = arith.constant 0 : i32
    %c0_i32_1 = arith.constant 0 : i32
    return %c0_i32, %c0_i32_0 : i32, i32
  }
  func.func @transform_2(%arg0: i32) -> (i32, i32) {
    %c0_i32 = arith.constant 0 : i32
    %c0_i32_0 = arith.constant 0 : i32
    %c0_i32_1 = arith.constant 0 : i32
    return %c0_i32, %c0_i32_0 : i32, i32
  }
  func.func @transform_3(%arg0: i32) -> (i32, i32) {
    %c0_i32 = arith.constant 0 : i32
    %c0_i32_0 = arith.constant 0 : i32
    return %arg0, %c0_i32 : i32, i32
  }
}

</mosaic_0001>

<llo_original>
// kernel: tpu_custom_call.1
$region0: #{tpu_custom_call.1}
  #allocation0 [shape = 'u32[]', space=smem, size = 0x4, offset = 0x4, fixed_abs, tag = 'smem constant byte address 0x4 - core index']
  #allocation1 [shape = 'u32[144,128]{1,0:T(1,128)}', space=vmem, size = 0x12000, scoped, tag = 'internal scratch']
  %s0 = inlined_call_operand.vmem [shape: bf16[1024,192], index: 0, kind: input, shape index: {}]
  %s1 = inlined_call_operand.vmem [shape: bf16[192,128], index: 1, kind: input, shape index: {}]
  %s2 = inlined_call_operand.vmem [shape: f32[1,128], index: 2, kind: input, shape index: {}]
  %s3 = inlined_call_operand.hbm [shape: f32[1024,128], index: 3, kind: output, shape index: {}]
  %s4 = sld [smem:[#allocation0]]
  $region45: #{tpu_custom_call.1} parent=0
    _
  %s6 = ssub.s32 1, %s4
  %s7 = scalar_select 0, %s6, %s4
  $region1: #{tpu_custom_call.1} parent=0
    #allocation2 [shape = 'u8[524288]{0}', space=vmem, size = 0x80000, scoped, tag = 'output window, operand 0']
    #allocation3 [shape = 's32[2]{0}', space=sflag, size = 0x8, scoped, tag = 'scoped memory for tpu_custom_call.1']
    %8 = vsyncpa [#allocation3], 0
    %s9 = scalar_lea.sflag [#allocation3], 1
    %10 = vsyncpa %s9, 0
    loop: start=0, step=1, limit=4
    $region2: #{tpu_custom_call.1} parent=1 // loop_pre_header
      _
    $region3: #{tpu_custom_call.1} parent=1 // loop_header
      %s12 = sphi 0, %s16
      %p13 = scmp.ge.s32.totalorder %s12, 4
      %s22 = sphi 0, %s24
      %s25 = sphi 0, %s22
      %s26 = sphi 0, %s25
      %s42 = sphi 0, %s26
      %s46 = sphi 0, %s46
      %s48 = sphi 0, %s46
      %s49 = sphi 0, %s48
      %s63 = sphi 0, %s49
      %s67 = sphi 0, %s67
      %s69 = sphi 0, %s67
      %s70 = sphi 0, %s69
      %s84 = sphi 0, %s70
      %s90 = sphi 0, %s92
      %s93 = sphi 0, %s90
      %s94 = sphi 0, %s93
      %s110 = sphi 0, %s94
    $region4: #{tpu_custom_call.1} parent=1 // loop_header_branch
      %15 = sbr.rel (%p13) target = $region8
    $region5: #{tpu_custom_call.1} parent=1 // loop_body
      %s17 = ssub.s32 %s12, 1
      %s18 = ssub.s32 %s12, 2
      %s19 = sadd.s32 %s12, 1
      %s20 = ssub.s32 %s12, %s19
      %p21 = scmp.eq.s32.totalorder %s20, 0
      %s23 = sadd.s32 %s22, 1
      %s24 = scalar_select %p21, %s22, %s23
      %p27 = pneg %p21
      %p28 = scmp.eq.s32.totalorder %s12, 1
      %p29 = por %p27, %p28
      %p30 = scmp.ne.s32.totalorder %s22, %s25
      %p31 = scmp.eq.s32.totalorder %s12, 0
      %p32 = por %p30, %p31
      %p33 = scmp.ne.s32.totalorder %s22, %s25
      %p34 = scmp.eq.s32.totalorder %s17, 1
      %p35 = por %p33, %p34
      %p36 = scmp.ne.s32.totalorder %s25, %s26
      %p37 = scmp.eq.s32.totalorder %s17, 0
      %p38 = por %p36, %p37
      %p39 = scmp.ne.s32.totalorder %s25, %s26
      %p40 = scmp.eq.s32.totalorder %s18, 1
      %p41 = por %p39, %p40
      %p43 = scmp.ne.s32.totalorder %s26, %s42
      %p44 = scmp.eq.s32.totalorder %s18, 0
      %p45 = por %p43, %p44
      %s47 = sadd.s32 %s46, 1
      %p50 = scmp.eq.s32.totalorder %s12, 1
      %p51 = scmp.ne.s32.totalorder %s46, %s48
      %p52 = scmp.eq.s32.totalorder %s12, 0
      %p53 = por %p51, %p52
      %p54 = scmp.ne.s32.totalorder %s46, %s48
      %p55 = scmp.eq.s32.totalorder %s17, 1
      %p56 = por %p54, %p55
      %p57 = scmp.ne.s32.totalorder %s48, %s49
      %p58 = scmp.eq.s32.totalorder %s17, 0
      %p59 = por %p57, %p58
      %p60 = scmp.ne.s32.totalorder %s48, %s49
      %p61 = scmp.eq.s32.totalorder %s18, 1
      %p62 = por %p60, %p61
      %p64 = scmp.ne.s32.totalorder %s49, %s63
      %p65 = scmp.eq.s32.totalorder %s18, 0
      %p66 = por %p64, %p65
      %s68 = sadd.s32 %s67, 1
      %p71 = scmp.eq.s32.totalorder %s12, 1
      %p72 = scmp.ne.s32.totalorder %s67, %s69
      %p73 = scmp.eq.s32.totalorder %s12, 0
      %p74 = por %p72, %p73
      %p75 = scmp.ne.s32.totalorder %s67, %s69
      %p76 = scmp.eq.s32.totalorder %s17, 1
      %p77 = por %p75, %p76
      %p78 = scmp.ne.s32.totalorder %s69, %s70
      %p79 = scmp.eq.s32.totalorder %s17, 0
      %p80 = por %p78, %p79
      %p81 = scmp.ne.s32.totalorder %s69, %s70
      %p82 = scmp.eq.s32.totalorder %s18, 1
      %p83 = por %p81, %p82
      %p85 = scmp.ne.s32.totalorder %s70, %s84
      %p86 = scmp.eq.s32.totalorder %s18, 0
      %p87 = por %p85, %p86
      %s88 = ssub.s32 %s12, %s19
      %p89 = scmp.eq.s32.totalorder %s88, 0
      %s91 = sadd.s32 %s90, 1
      %s92 = scalar_select %p89, %s90, %s91
      %p95 = pneg %p89
      %p96 = scmp.eq.s32.totalorder %s12, 1
      %p97 = por %p95, %p96
      %p98 = scmp.ne.s32.totalorder %s90, %s93
      %p99 = scmp.eq.s32.totalorder %s12, 0
      %p100 = por %p98, %p99
      %p101 = scmp.ne.s32.totalorder %s90, %s93
      %p102 = scmp.eq.s32.totalorder %s17, 1
      %p103 = por %p101, %p102
      %p104 = scmp.ne.s32.totalorder %s93, %s94
      %p105 = scmp.eq.s32.totalorder %s17, 0
      %p106 = por %p104, %p105
      %p107 = scmp.ne.s32.totalorder %s93, %s94
      %p108 = scmp.eq.s32.totalorder %s18, 1
      %p109 = por %p107, %p108
      %p111 = scmp.ne.s32.totalorder %s94, %s110
      %p112 = scmp.eq.s32.totalorder %s18, 0
      %p113 = por %p111, %p112
      %p114 = scmp.le.s32.totalorder 1, %s12
      %p115 = scmp.lt.s32.totalorder %s12, 3
      %p116 = pnand %p114, %p115
      %p117 = pneg %p116
      // Predicated region
      $region9: #{tpu_custom_call.1} parent=5 // pred_check
        _
      $region10: #{tpu_custom_call.1} parent=5 // pred_check_branch
        %119 = sbr.rel (%p116) target = $region12
      $region11: #{tpu_custom_call.1} parent=5 // pred_region
        %s120 = ssub.s32 %s12, 1
        // Predicated region
        $region13: #{tpu_custom_call.1} parent=11 // pred_check
          %p121 = pneg %p59
        $region14: #{tpu_custom_call.1} parent=11 // pred_check_branch
          %123 = sbr.rel (%p121) target = $region16
        $region15: #{tpu_custom_call.1} parent=11 // pred_region
          _
        $region16: #{tpu_custom_call.1} parent=11 // pred_fallthru
          _
        // Predicated region
        $region17: #{tpu_custom_call.1} parent=11 // pred_check
          %p124 = pneg %p80
        $region18: #{tpu_custom_call.1} parent=11 // pred_check_branch
          %126 = sbr.rel (%p124) target = $region20
        $region19: #{tpu_custom_call.1} parent=11 // pred_region
          _
        $region20: #{tpu_custom_call.1} parent=11 // pred_fallthru
          _
      $region12: #{tpu_custom_call.1} parent=5 // pred_fallthru
        _
      %p127 = scmp.lt.s32.totalorder %s12, 2
      // Predicated region
      $region21: #{tpu_custom_call.1} parent=5 // pred_check
        %p128 = pneg %p127
      $region22: #{tpu_custom_call.1} parent=5 // pred_check_branch
        %130 = sbr.rel (%p128) target = $region24
      $region23: #{tpu_custom_call.1} parent=5 // pred_region
        // Predicated region
        $region25: #{tpu_custom_call.1} parent=23 // pred_check
          %p131 = pneg %p32
        $region26: #{tpu_custom_call.1} parent=23 // pred_check_branch
          %133 = sbr.rel (%p131) target = $region28
        $region27: #{tpu_custom_call.1} parent=23 // pred_region
          %s134 = smul.u32 64, %s12
          %p135 = scmp.lt.s32.totalorder %s134, 127
          %s136 = scalar_select %p135, %s134, 127
          %s137 = smul.addr %s136, 2
          %s138 = smul.addr %s137, 4
          %s139 = scalar_lea.vmem %s0, %s138
          %s140 = smul.u32 64, %s12
        $region28: #{tpu_custom_call.1} parent=23 // pred_fallthru
          _
      $region24: #{tpu_custom_call.1} parent=5 // pred_fallthru
        _
      %p141 = scmp.le.s32.totalorder 1, %s12
      %p142 = scmp.lt.s32.totalorder %s12, 3
      %p143 = pnand %p141, %p142
      %p144 = pneg %p143
      // Predicated region
      $region29: #{tpu_custom_call.1} parent=5 // pred_check
        _
      $region30: #{tpu_custom_call.1} parent=5 // pred_check_branch
        %146 = sbr.rel (%p143) target = $region32
      $region31: #{tpu_custom_call.1} parent=5 // pred_region
        %s147 = ssub.s32 %s12, 1
        %s148 = smul.u32 64, %s17
        %p149 = scmp.lt.s32.totalorder %s148, 127
        %s150 = scalar_select %p149, %s148, 127
        %s151 = smul.addr %s150, 2
        %s152 = smul.addr %s151, 4
        %s153 = scalar_lea.vmem %s0, %s152
        %p154 = pneg %p38
        %p155 = pneg %p35
        %p156 = pneg %p59
        %p157 = pneg %p56
        %p158 = pneg %p80
        %p159 = pneg %p77
        %p160 = pneg %p106
        %p161 = pneg %p103
        %s162 = sand.u32 %s93, 1
        %s163 = scalar_lea.sflag [#allocation3], %s162
        %s164 = sand.u32 %s93, 1
        %s165 = smul.addr %s164, 512
        %s166 = scalar_lea.vmem [#allocation2], %s165
        %s167 = smul.u32 64, %s17
        %p168 = scmp.lt.s32.totalorder %s167, 127
        %s169 = scalar_select %p168, %s167, 127
        %s170 = smul.addr %s169, 2
        %s171 = smul.addr %s170, 4
        %s172 = scalar_lea.vmem %s0, %s171
        %s173 = smul.u32 64, %s17
        %s174 = smul.u32 64, %s17
        %v176 = vld [vmem:[%s172] sm:$0xff]
        %v177 = vld [vmem:[%s172 + $0x8] sm:$0xff]
        %v178 = vld [vmem:[%s172 + $0x10] sm:$0xff]
        %v179 = vld [vmem:[%s172 + $0x18] sm:$0xff]
        %v180 = vld [vmem:[%s172 + $0x20] sm:$0xff]
        %v181 = vld [vmem:[%s172 + $0x28] sm:$0xff]
        %v182 = vld [vmem:[%s172 + $0x30] sm:$0xff]
        %v183 = vld [vmem:[%s172 + $0x38] sm:$0xff]
        %v184 = vld [vmem:[%s172 + $0x40] sm:$0xff]
        %v185 = vld [vmem:[%s172 + $0x48] sm:$0xff]
        %v186 = vld [vmem:[%s172 + $0x50] sm:$0xff]
        %v187 = vld [vmem:[%s172 + $0x58] sm:$0xff]
        %v188 = vld [vmem:[%s172 + $0x60] sm:$0xff]
        %v189 = vld [vmem:[%s172 + $0x68] sm:$0xff]
        %v190 = vld [vmem:[%s172 + $0x70] sm:$0xff]
        %v191 = vld [vmem:[%s172 + $0x78] sm:$0xff]
        %v192 = vld [vmem:[%s172 + $0x80] sm:$0xff]
        %v193 = vld [vmem:[%s172 + $0x88] sm:$0xff]
        %v194 = vld [vmem:[%s172 + $0x90] sm:$0xff]
        %v195 = vld [vmem:[%s172 + $0x98] sm:$0xff]
        %v196 = vld [vmem:[%s172 + $0xa0] sm:$0xff]
        %v197 = vld [vmem:[%s172 + $0xa8] sm:$0xff]
        %v198 = vld [vmem:[%s172 + $0xb0] sm:$0xff]
        %v199 = vld [vmem:[%s172 + $0xb8] sm:$0xff]
        %v200 = vld [vmem:[%s172 + $0xc0] sm:$0xff]
        %v201 = vld [vmem:[%s172 + $0xc8] sm:$0xff]
        %v202 = vld [vmem:[%s172 + $0xd0] sm:$0xff]
        %v203 = vld [vmem:[%s172 + $0xd8] sm:$0xff]
        %v204 = vld [vmem:[%s172 + $0xe0] sm:$0xff]
        %v205 = vld [vmem:[%s172 + $0xe8] sm:$0xff]
        %v206 = vld [vmem:[%s172 + $0xf0] sm:$0xff]
        %v207 = vld [vmem:[%s172 + $0xf8] sm:$0xff]
        %v208 = vld [vmem:[%s172 + $0x100] sm:$0xff]
        %v209 = vld [vmem:[%s172 + $0x108] sm:$0xff]
        %v210 = vld [vmem:[%s172 + $0x110] sm:$0xff]
        %v211 = vld [vmem:[%s172 + $0x118] sm:$0xff]
        %v212 = vld [vmem:[%s172 + $0x120] sm:$0xff]
        %v213 = vld [vmem:[%s172 + $0x128] sm:$0xff]
        %v214 = vld [vmem:[%s172 + $0x130] sm:$0xff]
        %v215 = vld [vmem:[%s172 + $0x138] sm:$0xff]
        %v216 = vld [vmem:[%s172 + $0x140] sm:$0xff]
        %v217 = vld [vmem:[%s172 + $0x148] sm:$0xff]
        %v218 = vld [vmem:[%s172 + $0x150] sm:$0xff]
        %v219 = vld [vmem:[%s172 + $0x158] sm:$0xff]
        %v220 = vld [vmem:[%s172 + $0x160] sm:$0xff]
        %v221 = vld [vmem:[%s172 + $0x168] sm:$0xff]
        %v222 = vld [vmem:[%s172 + $0x170] sm:$0xff]
        %v223 = vld [vmem:[%s172 + $0x178] sm:$0xff]
        %v224 = vld [vmem:[%s172 + $0x180] sm:$0xff]
        %v225 = vld [vmem:[%s172 + $0x188] sm:$0xff]
        %v226 = vld [vmem:[%s172 + $0x190] sm:$0xff]
        %v227 = vld [vmem:[%s172 + $0x198] sm:$0xff]
        %v228 = vld [vmem:[%s172 + $0x1a0] sm:$0xff]
        %v229 = vld [vmem:[%s172 + $0x1a8] sm:$0xff]
        %v230 = vld [vmem:[%s172 + $0x1b0] sm:$0xff]
        %v231 = vld [vmem:[%s172 + $0x1b8] sm:$0xff]
        %v232 = vld [vmem:[%s172 + $0x1c0] sm:$0xff]
        %v233 = vld [vmem:[%s172 + $0x1c8] sm:$0xff]
        %v234 = vld [vmem:[%s172 + $0x1d0] sm:$0xff]
        %v235 = vld [vmem:[%s172 + $0x1d8] sm:$0xff]
        %v236 = vld [vmem:[%s172 + $0x1e0] sm:$0xff]
        %v237 = vld [vmem:[%s172 + $0x1e8] sm:$0xff]
        %v238 = vld [vmem:[%s172 + $0x1f0] sm:$0xff]
        %v239 = vld [vmem:[%s172 + $0x1f8] sm:$0xff]
        %v240 = vld [vmem:[%s1] sm:$0xf]
        %v241 = vld [vmem:[%s1 + $0x4] sm:$0xf]
        %v242 = vld [vmem:[%s1 + $0x8] sm:$0xf]
        %v243 = vld [vmem:[%s1 + $0xc] sm:$0xf]
        %v244 = vld [vmem:[%s1 + $0x10] sm:$0xf]
        %v245 = vld [vmem:[%s1 + $0x14] sm:$0xf]
        %v246 = vld [vmem:[%s1 + $0x18] sm:$0xf]
        %v247 = vld [vmem:[%s1 + $0x1c] sm:$0xf]
        %v248 = vld [vmem:[%s1 + $0x20] sm:$0xf]
        %v249 = vld [vmem:[%s1 + $0x24] sm:$0xf]
        %v250 = vld [vmem:[%s1 + $0x28] sm:$0xf]
        %v251 = vld [vmem:[%s1 + $0x2c] sm:$0xf]
        %v252 = vld [vmem:[%s1 + $0x30] sm:$0xf]
        %v253 = vld [vmem:[%s1 + $0x34] sm:$0xf]
        %v254 = vld [vmem:[%s1 + $0x38] sm:$0xf]
        %v255 = vld [vmem:[%s1 + $0x3c] sm:$0xf]
        %v256 = vld [vmem:[%s1 + $0x40] sm:$0xf]
        %v257 = vld [vmem:[%s1 + $0x44] sm:$0xf]
        %v258 = vld [vmem:[%s1 + $0x48] sm:$0xf]
        %v259 = vld [vmem:[%s1 + $0x4c] sm:$0xf]
        %v260 = vld [vmem:[%s1 + $0x50] sm:$0xf]
        %v261 = vld [vmem:[%s1 + $0x54] sm:$0xf]
        %v262 = vld [vmem:[%s1 + $0x58] sm:$0xf]
        %v263 = vld [vmem:[%s1 + $0x5c] sm:$0xf]
        %v264 = vld [vmem:[%s2] sm:$0x1]
        %v266 = vlaneseq
        %v267 = vshrl.u32 %v266, 7
        %v268 = vsub.s32 0, %v267
        %v269 = vrot.slane %v264, %v268
        %v335 = vunpack.c.l.b16 %v176
        %v336 = vunpack.c.h.b16 %v176
        %v337 = vunpack.c.l.b16 %v177
        %v338 = vunpack.c.h.b16 %v177
        %v339 = vunpack.c.l.b16 %v178
        %v340 = vunpack.c.h.b16 %v178
        %v341 = vunpack.c.l.b16 %v179
        %v342 = vunpack.c.h.b16 %v179
        %v343 = vunpack.c.l.b16 %v180
        %v344 = vunpack.c.h.b16 %v180
        %v345 = vunpack.c.l.b16 %v181
        %v346 = vunpack.c.h.b16 %v181
        %v347 = vunpack.c.l.b16 %v182
        %v348 = vunpack.c.h.b16 %v182
        %v349 = vunpack.c.l.b16 %v183
        %v350 = vunpack.c.h.b16 %v183
        %v351 = vunpack.c.l.b16 %v184
        %v352 = vunpack.c.h.b16 %v184
        %v353 = vunpack.c.l.b16 %v185
        %v354 = vunpack.c.h.b16 %v185
        %v355 = vunpack.c.l.b16 %v186
        %v356 = vunpack.c.h.b16 %v186
        %v357 = vunpack.c.l.b16 %v187
        %v358 = vunpack.c.h.b16 %v187
        %v359 = vunpack.c.l.b16 %v188
        %v360 = vunpack.c.h.b16 %v188
        %v361 = vunpack.c.l.b16 %v189
        %v362 = vunpack.c.h.b16 %v189
        %v363 = vunpack.c.l.b16 %v190
        %v364 = vunpack.c.h.b16 %v190
        %v365 = vunpack.c.l.b16 %v191
        %v366 = vunpack.c.h.b16 %v191
        %v367 = vunpack.c.l.b16 %v192
        %v368 = vunpack.c.h.b16 %v192
        %v369 = vunpack.c.l.b16 %v193
        %v370 = vunpack.c.h.b16 %v193
        %v371 = vunpack.c.l.b16 %v194
        %v372 = vunpack.c.h.b16 %v194
        %v373 = vunpack.c.l.b16 %v195
        %v374 = vunpack.c.h.b16 %v195
        %v375 = vunpack.c.l.b16 %v196
        %v376 = vunpack.c.h.b16 %v196
        %v377 = vunpack.c.l.b16 %v197
        %v378 = vunpack.c.h.b16 %v197
        %v379 = vunpack.c.l.b16 %v198
        %v380 = vunpack.c.h.b16 %v198
        %v381 = vunpack.c.l.b16 %v199
        %v382 = vunpack.c.h.b16 %v199
        %v383 = vunpack.c.l.b16 %v200
        %v384 = vunpack.c.h.b16 %v200
        %v385 = vunpack.c.l.b16 %v201
        %v386 = vunpack.c.h.b16 %v201
        %v387 = vunpack.c.l.b16 %v202
        %v388 = vunpack.c.h.b16 %v202
        %v389 = vunpack.c.l.b16 %v203
        %v390 = vunpack.c.h.b16 %v203
        %v391 = vunpack.c.l.b16 %v204
        %v392 = vunpack.c.h.b16 %v204
        %v393 = vunpack.c.l.b16 %v205
        %v394 = vunpack.c.h.b16 %v205
        %v395 = vunpack.c.l.b16 %v206
        %v396 = vunpack.c.h.b16 %v206
        %v397 = vunpack.c.l.b16 %v207
        %v398 = vunpack.c.h.b16 %v207
        %v399 = vunpack.c.l.b16 %v208
        %v400 = vunpack.c.h.b16 %v208
        %v401 = vunpack.c.l.b16 %v209
        %v402 = vunpack.c.h.b16 %v209
        %v403 = vunpack.c.l.b16 %v210
        %v404 = vunpack.c.h.b16 %v210
        %v405 = vunpack.c.l.b16 %v211
        %v406 = vunpack.c.h.b16 %v211
        %v407 = vunpack.c.l.b16 %v212
        %v408 = vunpack.c.h.b16 %v212
        %v409 = vunpack.c.l.b16 %v213
        %v410 = vunpack.c.h.b16 %v213
        %v411 = vunpack.c.l.b16 %v214
        %v412 = vunpack.c.h.b16 %v214
        %v413 = vunpack.c.l.b16 %v215
        %v414 = vunpack.c.h.b16 %v215
        %v415 = vunpack.c.l.b16 %v216
        %v416 = vunpack.c.h.b16 %v216
        %v417 = vunpack.c.l.b16 %v217
        %v418 = vunpack.c.h.b16 %v217
        %v419 = vunpack.c.l.b16 %v218
        %v420 = vunpack.c.h.b16 %v218
        %v421 = vunpack.c.l.b16 %v219
        %v422 = vunpack.c.h.b16 %v219
        %v423 = vunpack.c.l.b16 %v220
        %v424 = vunpack.c.h.b16 %v220
        %v425 = vunpack.c.l.b16 %v221
        %v426 = vunpack.c.h.b16 %v221
        %v427 = vunpack.c.l.b16 %v222
        %v428 = vunpack.c.h.b16 %v222
        %v429 = vunpack.c.l.b16 %v223
        %v430 = vunpack.c.h.b16 %v223
        %v431 = vunpack.c.l.b16 %v224
        %v432 = vunpack.c.h.b16 %v224
        %v433 = vunpack.c.l.b16 %v225
        %v434 = vunpack.c.h.b16 %v225
        %v435 = vunpack.c.l.b16 %v226
        %v436 = vunpack.c.h.b16 %v226
        %v437 = vunpack.c.l.b16 %v227
        %v438 = vunpack.c.h.b16 %v227
        %v439 = vunpack.c.l.b16 %v228
        %v440 = vunpack.c.h.b16 %v228
        %v441 = vunpack.c.l.b16 %v229
        %v442 = vunpack.c.h.b16 %v229
        %v443 = vunpack.c.l.b16 %v230
        %v444 = vunpack.c.h.b16 %v230
        %v445 = vunpack.c.l.b16 %v231
        %v446 = vunpack.c.h.b16 %v231
        %v447 = vunpack.c.l.b16 %v232
        %v448 = vunpack.c.h.b16 %v232
        %v449 = vunpack.c.l.b16 %v233
        %v450 = vunpack.c.h.b16 %v233
        %v451 = vunpack.c.l.b16 %v234
        %v452 = vunpack.c.h.b16 %v234
        %v453 = vunpack.c.l.b16 %v235
        %v454 = vunpack.c.h.b16 %v235
        %v455 = vunpack.c.l.b16 %v236
        %v456 = vunpack.c.h.b16 %v236
        %v457 = vunpack.c.l.b16 %v237
        %v458 = vunpack.c.h.b16 %v237
        %v459 = vunpack.c.l.b16 %v238
        %v460 = vunpack.c.h.b16 %v238
        %v461 = vunpack.c.l.b16 %v239
        %v462 = vunpack.c.h.b16 %v239
        %v463 = vpack.c.b16 %v337, %v335
        %v464 = vpack.c.b16 %v338, %v336
        %v465 = vpack.c.b16 %v341, %v339
        %v466 = vpack.c.b16 %v342, %v340
        %v467 = vpack.c.b16 %v345, %v343
        %v468 = vpack.c.b16 %v346, %v344
        %v469 = vpack.c.b16 %v349, %v347
        %v470 = vpack.c.b16 %v350, %v348
        %v471 = vpack.c.b16 %v353, %v351
        %v472 = vpack.c.b16 %v354, %v352
        %v473 = vpack.c.b16 %v357, %v355
        %v474 = vpack.c.b16 %v358, %v356
        %v475 = vpack.c.b16 %v361, %v359
        %v476 = vpack.c.b16 %v362, %v360
        %v477 = vpack.c.b16 %v365, %v363
        %v478 = vpack.c.b16 %v366, %v364
        %v479 = vpack.c.b16 %v369, %v367
        %v480 = vpack.c.b16 %v370, %v368
        %v481 = vpack.c.b16 %v373, %v371
        %v482 = vpack.c.b16 %v374, %v372
        %v483 = vpack.c.b16 %v377, %v375
        %v484 = vpack.c.b16 %v378, %v376
        %v485 = vpack.c.b16 %v381, %v379
        %v486 = vpack.c.b16 %v382, %v380
        %v487 = vpack.c.b16 %v385, %v383
        %v488 = vpack.c.b16 %v386, %v384
        %v489 = vpack.c.b16 %v389, %v387
        %v490 = vpack.c.b16 %v390, %v388
        %v491 = vpack.c.b16 %v393, %v391
        %v492 = vpack.c.b16 %v394, %v392
        %v493 = vpack.c.b16 %v397, %v395
        %v494 = vpack.c.b16 %v398, %v396
        %v495 = vpack.c.b16 %v401, %v399
        %v496 = vpack.c.b16 %v402, %v400
        %v497 = vpack.c.b16 %v405, %v403
        %v498 = vpack.c.b16 %v406, %v404
        %v499 = vpack.c.b16 %v409, %v407
        %v500 = vpack.c.b16 %v410, %v408
        %v501 = vpack.c.b16 %v413, %v411
        %v502 = vpack.c.b16 %v414, %v412
        %v503 = vpack.c.b16 %v417, %v415
        %v504 = vpack.c.b16 %v418, %v416
        %v505 = vpack.c.b16 %v421, %v419
        %v506 = vpack.c.b16 %v422, %v420
        %v507 = vpack.c.b16 %v425, %v423
        %v508 = vpack.c.b16 %v426, %v424
        %v509 = vpack.c.b16 %v429, %v427
        %v510 = vpack.c.b16 %v430, %v428
        %v511 = vpack.c.b16 %v433, %v431
        %v512 = vpack.c.b16 %v434, %v432
        %v513 = vpack.c.b16 %v437, %v435
        %v514 = vpack.c.b16 %v438, %v436
        %v515 = vpack.c.b16 %v441, %v439
        %v516 = vpack.c.b16 %v442, %v440
        %v517 = vpack.c.b16 %v445, %v443
        %v518 = vpack.c.b16 %v446, %v444
        %v519 = vpack.c.b16 %v449, %v447
        %v520 = vpack.c.b16 %v450, %v448
        %v521 = vpack.c.b16 %v453, %v451
        %v522 = vpack.c.b16 %v454, %v452
        %v523 = vpack.c.b16 %v457, %v455
        %v524 = vpack.c.b16 %v458, %v456
        %v525 = vpack.c.b16 %v461, %v459
        %v526 = vpack.c.b16 %v462, %v460
        %v583 = vunpack.c.l.b16 %v240
        %v584 = vunpack.c.l.b16 %v241
        %v585 = vunpack.c.l.b16 %v242
        %v586 = vunpack.c.l.b16 %v243
        %v587 = vunpack.c.l.b16 %v244
        %v588 = vunpack.c.l.b16 %v245
        %v589 = vunpack.c.l.b16 %v246
        %v590 = vunpack.c.l.b16 %v247
        %v591 = vunpack.c.l.b16 %v248
        %v592 = vunpack.c.l.b16 %v249
        %v593 = vunpack.c.l.b16 %v250
        %v594 = vunpack.c.l.b16 %v251
        %v595 = vunpack.c.l.b16 %v252
        %v596 = vunpack.c.l.b16 %v253
        %v597 = vunpack.c.l.b16 %v254
        %v598 = vunpack.c.l.b16 %v255
        %v599 = vunpack.c.l.b16 %v256
        %v600 = vunpack.c.l.b16 %v257
        %v601 = vunpack.c.l.b16 %v258
        %v602 = vunpack.c.l.b16 %v259
        %v603 = vunpack.c.l.b16 %v260
        %v604 = vunpack.c.l.b16 %v261
        %v605 = vunpack.c.l.b16 %v262
        %v606 = vunpack.c.l.b16 %v263
        %v607 = vpack.c.b16 %v584, %v583
        %v608 = vpack.c.b16 %v586, %v585
        %v609 = vpack.c.b16 %v588, %v587
        %v610 = vpack.c.b16 %v590, %v589
        %v611 = vpack.c.b16 %v592, %v591
        %v612 = vpack.c.b16 %v594, %v593
        %v613 = vpack.c.b16 %v596, %v595
        %v614 = vpack.c.b16 %v598, %v597
        %v615 = vpack.c.b16 %v600, %v599
        %v616 = vpack.c.b16 %v602, %v601
        %v617 = vpack.c.b16 %v604, %v603
        %v618 = vpack.c.b16 %v606, %v605
        %vm631 = vcmask 523264
        %v633 = vsel %vm631, %v464, 0
        %v636 = vsel %vm631, %v466, 0
        %v639 = vsel %vm631, %v468, 0
        %v642 = vsel %vm631, %v470, 0
        %v645 = vsel %vm631, %v472, 0
        %v648 = vsel %vm631, %v474, 0
        %v651 = vsel %vm631, %v476, 0
        %v654 = vsel %vm631, %v478, 0
        %v657 = vsel %vm631, %v480, 0
        %v660 = vsel %vm631, %v482, 0
        %v663 = vsel %vm631, %v484, 0
        %v666 = vsel %vm631, %v486, 0
        %v669 = vsel %vm631, %v488, 0
        %v672 = vsel %vm631, %v490, 0
        %v675 = vsel %vm631, %v492, 0
        %v678 = vsel %vm631, %v494, 0
        %v681 = vsel %vm631, %v496, 0
        %v684 = vsel %vm631, %v498, 0
        %v687 = vsel %vm631, %v500, 0
        %v690 = vsel %vm631, %v502, 0
        %v693 = vsel %vm631, %v504, 0
        %v696 = vsel %vm631, %v506, 0
        %v699 = vsel %vm631, %v508, 0
        %v702 = vsel %vm631, %v510, 0
        %v705 = vsel %vm631, %v512, 0
        %v708 = vsel %vm631, %v514, 0
        %v711 = vsel %vm631, %v516, 0
        %v714 = vsel %vm631, %v518, 0
        %v717 = vsel %vm631, %v520, 0
        %v720 = vsel %vm631, %v522, 0
        %v723 = vsel %vm631, %v524, 0
        %v726 = vsel %vm631, %v526, 0
        %728 = vmatprep.subr.bf16.mxu0 0
        %729 = vmatpush1.bf16.msra.mxu0 %v614
        %730 = vmatprep.subr.bf16.mxu0 0
        %731 = vmatpush1.bf16.msra.mxu0 %v613
        %732 = vmatprep.subr.bf16.mxu0 0
        %733 = vmatpush1.bf16.msra.mxu0 %v612
        %734 = vmatprep.subr.bf16.mxu0 0
        %735 = vmatpush1.bf16.msra.mxu0 %v611
        %736 = vmatprep.subr.bf16.mxu0 0
        %737 = vmatpush1.bf16.msra.mxu0 %v610
        %738 = vmatprep.subr.bf16.mxu0 0
        %739 = vmatpush1.bf16.msra.mxu0 %v609
        %740 = vmatprep.subr.bf16.mxu0 0
        %741 = vmatpush1.bf16.msra.mxu0 %v608
        %742 = vmatprep.subr.bf16.mxu0 0
        %743 = vmatpush1.bf16.msra.mxu0 %v607
        %744 = vmatprep.subr.bf16.mxu0 0
        %745 = vmatpush2.bf16.msra.mxu0 0
        %746 = vmatprep.subr.bf16.mxu0 0
        %747 = vmatpush2.bf16.msra.mxu0 0
        %748 = vmatprep.subr.bf16.mxu0 0
        %749 = vmatpush2.bf16.msra.mxu0 0
        %750 = vmatprep.subr.bf16.mxu0 0
        %751 = vmatpush2.bf16.msra.mxu0 0
        %752 = vmatprep.subr.bf16.mxu0 0
        %753 = vmatpush2.bf16.msra.mxu0 %v618
        %754 = vmatprep.subr.bf16.mxu0 0
        %755 = vmatpush2.bf16.msra.mxu0 %v617
        %756 = vmatprep.subr.bf16.mxu0 0
        %757 = vmatpush2.bf16.msra.mxu0 %v616
        %758 = vmatprep.subr.bf16.mxu0 0
        %759 = vmatpush2.bf16.msra.mxu0 %v615
        %760 = vmatprep.mubr.bf16.mxu0 %v633
        %761 = vmatmul.mubr.bf16.gmra.mxu0 %v463
        %v762 = vpop.f32.mrf.mxu0
        %v763 = vadd.f32 %v269, %v762
        %v764 = vpop.f32.mrf.mxu0
        %v765 = vpop.f32.mrf.mxu0
        %v766 = vadd.f32 %v269, %v765
        %v767 = vpop.f32.mrf.mxu0
        %768 = vmatprep.mubr.bf16.mxu0 %v636
        %769 = vmatmul.mubr.bf16.gmra.mxu0 %v465
        %v770 = vpop.f32.mrf.mxu0
        %v771 = vadd.f32 %v269, %v770
        %v772 = vpop.f32.mrf.mxu0
        %v773 = vpop.f32.mrf.mxu0
        %v774 = vadd.f32 %v269, %v773
        %v775 = vpop.f32.mrf.mxu0
        %776 = vmatprep.mubr.bf16.mxu0 %v639
        %777 = vmatmul.mubr.bf16.gmra.mxu0 %v467
        %v778 = vpop.f32.mrf.mxu0
        %v779 = vadd.f32 %v269, %v778
        %v780 = vpop.f32.mrf.mxu0
        %v781 = vpop.f32.mrf.mxu0
        %v782 = vadd.f32 %v269, %v781
        %v783 = vpop.f32.mrf.mxu0
        %784 = vmatprep.mubr.bf16.mxu0 %v642
        %785 = vmatmul.mubr.bf16.gmra.mxu0 %v469
        %v786 = vpop.f32.mrf.mxu0
        %v787 = vadd.f32 %v269, %v786
        %v788 = vpop.f32.mrf.mxu0
        %v789 = vpop.f32.mrf.mxu0
        %v790 = vadd.f32 %v269, %v789
        %v791 = vpop.f32.mrf.mxu0
        %792 = vmatprep.mubr.bf16.mxu0 %v645
        %793 = vmatmul.mubr.bf16.gmra.mxu0 %v471
        %v794 = vpop.f32.mrf.mxu0
        %v795 = vadd.f32 %v269, %v794
        %v796 = vpop.f32.mrf.mxu0
        %v797 = vpop.f32.mrf.mxu0
        %v798 = vadd.f32 %v269, %v797
        %v799 = vpop.f32.mrf.mxu0
        %800 = vmatprep.mubr.bf16.mxu0 %v648
        %801 = vmatmul.mubr.bf16.gmra.mxu0 %v473
        %v802 = vpop.f32.mrf.mxu0
        %v803 = vadd.f32 %v269, %v802
        %v804 = vpop.f32.mrf.mxu0
        %v805 = vpop.f32.mrf.mxu0
        %v806 = vadd.f32 %v269, %v805
        %v807 = vpop.f32.mrf.mxu0
        %808 = vmatprep.mubr.bf16.mxu0 %v651
        %809 = vmatmul.mubr.bf16.gmra.mxu0 %v475
        %v810 = vpop.f32.mrf.mxu0
        %v811 = vadd.f32 %v269, %v810
        %v812 = vpop.f32.mrf.mxu0
        %v813 = vpop.f32.mrf.mxu0
        %v814 = vadd.f32 %v269, %v813
        %v815 = vpop.f32.mrf.mxu0
        %816 = vmatprep.mubr.bf16.mxu0 %v654
        %817 = vmatmul.mubr.bf16.gmra.mxu0 %v477
        %v818 = vpop.f32.mrf.mxu0
        %v819 = vadd.f32 %v269, %v818
        %v820 = vpop.f32.mrf.mxu0
        %v821 = vpop.f32.mrf.mxu0
        %v822 = vadd.f32 %v269, %v821
        %v823 = vpop.f32.mrf.mxu0
        %824 = vmatprep.mubr.bf16.mxu0 %v657
        %825 = vmatmul.mubr.bf16.gmra.mxu0 %v479
        %v826 = vpop.f32.mrf.mxu0
        %v827 = vadd.f32 %v269, %v826
        %v828 = vpop.f32.mrf.mxu0
        %v829 = vpop.f32.mrf.mxu0
        %v830 = vadd.f32 %v269, %v829
        %v831 = vpop.f32.mrf.mxu0
        %832 = vmatprep.mubr.bf16.mxu0 %v660
        %833 = vmatmul.mubr.bf16.gmra.mxu0 %v481
        %v834 = vpop.f32.mrf.mxu0
        %v835 = vadd.f32 %v269, %v834
        %v836 = vpop.f32.mrf.mxu0
        %v837 = vpop.f32.mrf.mxu0
        %v838 = vadd.f32 %v269, %v837
        %v839 = vpop.f32.mrf.mxu0
        %840 = vmatprep.mubr.bf16.mxu0 %v663
        %841 = vmatmul.mubr.bf16.gmra.mxu0 %v483
        %v842 = vpop.f32.mrf.mxu0
        %v843 = vadd.f32 %v269, %v842
        %v844 = vpop.f32.mrf.mxu0
        %v845 = vpop.f32.mrf.mxu0
        %v846 = vadd.f32 %v269, %v845
        %v847 = vpop.f32.mrf.mxu0
        %848 = vmatprep.mubr.bf16.mxu0 %v666
        %849 = vmatmul.mubr.bf16.gmra.mxu0 %v485
        %v850 = vpop.f32.mrf.mxu0
        %v851 = vadd.f32 %v269, %v850
        %v852 = vpop.f32.mrf.mxu0
        %v853 = vpop.f32.mrf.mxu0
        %v854 = vadd.f32 %v269, %v853
        %v855 = vpop.f32.mrf.mxu0
        %856 = vmatprep.mubr.bf16.mxu0 %v669
        %857 = vmatmul.mubr.bf16.gmra.mxu0 %v487
        %v858 = vpop.f32.mrf.mxu0
        %v859 = vadd.f32 %v269, %v858
        %v860 = vpop.f32.mrf.mxu0
        %v861 = vpop.f32.mrf.mxu0
        %v862 = vadd.f32 %v269, %v861
        %v863 = vpop.f32.mrf.mxu0
        %864 = vmatprep.mubr.bf16.mxu0 %v672
        %865 = vmatmul.mubr.bf16.gmra.mxu0 %v489
        %v866 = vpop.f32.mrf.mxu0
        %v867 = vadd.f32 %v269, %v866
        %v868 = vpop.f32.mrf.mxu0
        %v869 = vpop.f32.mrf.mxu0
        %v870 = vadd.f32 %v269, %v869
        %v871 = vpop.f32.mrf.mxu0
        %872 = vmatprep.mubr.bf16.mxu0 %v675
        %873 = vmatmul.mubr.bf16.gmra.mxu0 %v491
        %v874 = vpop.f32.mrf.mxu0
        %v875 = vadd.f32 %v269, %v874
        %v876 = vpop.f32.mrf.mxu0
        %v877 = vpop.f32.mrf.mxu0
        %v878 = vadd.f32 %v269, %v877
        %v879 = vpop.f32.mrf.mxu0
        %880 = vmatprep.mubr.bf16.mxu0 %v678
        %881 = vmatmul.mubr.bf16.gmra.mxu0 %v493
        %v882 = vpop.f32.mrf.mxu0
        %v883 = vadd.f32 %v269, %v882
        %v884 = vpop.f32.mrf.mxu0
        %v885 = vpop.f32.mrf.mxu0
        %v886 = vadd.f32 %v269, %v885
        %v887 = vpop.f32.mrf.mxu0
        %888 = vmatprep.mubr.bf16.mxu0 %v681
        %889 = vmatmul.mubr.bf16.gmra.mxu0 %v495
        %v890 = vpop.f32.mrf.mxu0
        %v891 = vadd.f32 %v269, %v890
        %v892 = vpop.f32.mrf.mxu0
        %v893 = vpop.f32.mrf.mxu0
        %v894 = vadd.f32 %v269, %v893
        %v895 = vpop.f32.mrf.mxu0
        %896 = vmatprep.mubr.bf16.mxu0 %v684
        %897 = vmatmul.mubr.bf16.gmra.mxu0 %v497
        %v898 = vpop.f32.mrf.mxu0
        %v899 = vadd.f32 %v269, %v898
        %v900 = vpop.f32.mrf.mxu0
        %v901 = vpop.f32.mrf.mxu0
        %v902 = vadd.f32 %v269, %v901
        %v903 = vpop.f32.mrf.mxu0
        %904 = vmatprep.mubr.bf16.mxu0 %v687
        %905 = vmatmul.mubr.bf16.gmra.mxu0 %v499
        %v906 = vpop.f32.mrf.mxu0
        %v907 = vadd.f32 %v269, %v906
        %v908 = vpop.f32.mrf.mxu0
        %v909 = vpop.f32.mrf.mxu0
        %v910 = vadd.f32 %v269, %v909
        %v911 = vpop.f32.mrf.mxu0
        %912 = vmatprep.mubr.bf16.mxu0 %v690
        %913 = vmatmul.mubr.bf16.gmra.mxu0 %v501
        %v914 = vpop.f32.mrf.mxu0
        %v915 = vadd.f32 %v269, %v914
        %v916 = vpop.f32.mrf.mxu0
        %v917 = vpop.f32.mrf.mxu0
        %v918 = vadd.f32 %v269, %v917
        %v919 = vpop.f32.mrf.mxu0
        %920 = vmatprep.mubr.bf16.mxu0 %v693
        %921 = vmatmul.mubr.bf16.gmra.mxu0 %v503
        %v922 = vpop.f32.mrf.mxu0
        %v923 = vadd.f32 %v269, %v922
        %v924 = vpop.f32.mrf.mxu0
        %v925 = vpop.f32.mrf.mxu0
        %v926 = vadd.f32 %v269, %v925
        %v927 = vpop.f32.mrf.mxu0
        %928 = vmatprep.mubr.bf16.mxu0 %v696
        %929 = vmatmul.mubr.bf16.gmra.mxu0 %v505
        %v930 = vpop.f32.mrf.mxu0
        %v931 = vadd.f32 %v269, %v930
        %v932 = vpop.f32.mrf.mxu0
        %v933 = vpop.f32.mrf.mxu0
        %v934 = vadd.f32 %v269, %v933
        %v935 = vpop.f32.mrf.mxu0
        %936 = vmatprep.mubr.bf16.mxu0 %v699
        %937 = vmatmul.mubr.bf16.gmra.mxu0 %v507
        %v938 = vpop.f32.mrf.mxu0
        %v939 = vadd.f32 %v269, %v938
        %v940 = vpop.f32.mrf.mxu0
        %v941 = vpop.f32.mrf.mxu0
        %v942 = vadd.f32 %v269, %v941
        %v943 = vpop.f32.mrf.mxu0
        %944 = vmatprep.mubr.bf16.mxu0 %v702
        %945 = vmatmul.mubr.bf16.gmra.mxu0 %v509
        %v946 = vpop.f32.mrf.mxu0
        %v947 = vadd.f32 %v269, %v946
        %v948 = vpop.f32.mrf.mxu0
        %v949 = vpop.f32.mrf.mxu0
        %v950 = vadd.f32 %v269, %v949
        %v951 = vpop.f32.mrf.mxu0
        %952 = vmatprep.mubr.bf16.mxu0 %v705
        %953 = vmatmul.mubr.bf16.gmra.mxu0 %v511
        %v954 = vpop.f32.mrf.mxu0
        %v955 = vadd.f32 %v269, %v954
        %v956 = vpop.f32.mrf.mxu0
        %v957 = vpop.f32.mrf.mxu0
        %v958 = vadd.f32 %v269, %v957
        %v959 = vpop.f32.mrf.mxu0
        %960 = vmatprep.mubr.bf16.mxu0 %v708
        %961 = vmatmul.mubr.bf16.gmra.mxu0 %v513
        %v962 = vpop.f32.mrf.mxu0
        %v963 = vadd.f32 %v269, %v962
        %v964 = vpop.f32.mrf.mxu0
        %v965 = vpop.f32.mrf.mxu0
        %v966 = vadd.f32 %v269, %v965
        %v967 = vpop.f32.mrf.mxu0
        %968 = vmatprep.mubr.bf16.mxu0 %v711
        %969 = vmatmul.mubr.bf16.gmra.mxu0 %v515
        %v970 = vpop.f32.mrf.mxu0
        %v971 = vadd.f32 %v269, %v970
        %v972 = vpop.f32.mrf.mxu0
        %v973 = vpop.f32.mrf.mxu0
        %v974 = vadd.f32 %v269, %v973
        %v975 = vpop.f32.mrf.mxu0
        %976 = vmatprep.mubr.bf16.mxu0 %v714
        %977 = vmatmul.mubr.bf16.gmra.mxu0 %v517
        %v978 = vpop.f32.mrf.mxu0
        %v979 = vadd.f32 %v269, %v978
        %v980 = vpop.f32.mrf.mxu0
        %v981 = vpop.f32.mrf.mxu0
        %v982 = vadd.f32 %v269, %v981
        %v983 = vpop.f32.mrf.mxu0
        %984 = vmatprep.mubr.bf16.mxu0 %v717
        %985 = vmatmul.mubr.bf16.gmra.mxu0 %v519
        %v986 = vpop.f32.mrf.mxu0
        %v987 = vadd.f32 %v269, %v986
        %v988 = vpop.f32.mrf.mxu0
        %v989 = vpop.f32.mrf.mxu0
        %v990 = vadd.f32 %v269, %v989
        %v991 = vpop.f32.mrf.mxu0
        %992 = vmatprep.mubr.bf16.mxu0 %v720
        %993 = vmatmul.mubr.bf16.gmra.mxu0 %v521
        %v994 = vpop.f32.mrf.mxu0
        %v995 = vadd.f32 %v269, %v994
        %v996 = vpop.f32.mrf.mxu0
        %v997 = vpop.f32.mrf.mxu0
        %v998 = vadd.f32 %v269, %v997
        %v999 = vpop.f32.mrf.mxu0
        %1000 = vmatprep.mubr.bf16.mxu0 %v723
        %1001 = vmatmul.mubr.bf16.gmra.mxu0 %v523
        %v1002 = vpop.f32.mrf.mxu0
        %v1003 = vadd.f32 %v269, %v1002
        %v1004 = vpop.f32.mrf.mxu0
        %v1005 = vpop.f32.mrf.mxu0
        %v1006 = vadd.f32 %v269, %v1005
        %v1007 = vpop.f32.mrf.mxu0
        %1008 = vmatprep.mubr.bf16.mxu0 %v726
        %1009 = vmatmul.mubr.bf16.gmra.mxu0 %v525
        %v1010 = vpop.f32.mrf.mxu0
        %v1011 = vadd.f32 %v269, %v1010
        %v1012 = vpop.f32.mrf.mxu0
        %v1013 = vpop.f32.mrf.mxu0
        %v1014 = vadd.f32 %v269, %v1013
        %v1015 = vpop.f32.mrf.mxu0
        %1016 = vdwg.mxu0
        %vm1017 = vcmp.gt.f32.partialorder %v763, 0.0
        %vm1018 = vcmp.gt.f32.partialorder %v766, 0.0
        %vm1019 = vcmp.gt.f32.partialorder %v771, 0.0
        %vm1020 = vcmp.gt.f32.partialorder %v774, 0.0
        %vm1021 = vcmp.gt.f32.partialorder %v779, 0.0
        %vm1022 = vcmp.gt.f32.partialorder %v782, 0.0
        %vm1023 = vcmp.gt.f32.partialorder %v787, 0.0
        %vm1024 = vcmp.gt.f32.partialorder %v790, 0.0
        %vm1025 = vcmp.gt.f32.partialorder %v795, 0.0
        %vm1026 = vcmp.gt.f32.partialorder %v798, 0.0
        %vm1027 = vcmp.gt.f32.partialorder %v803, 0.0
        %vm1028 = vcmp.gt.f32.partialorder %v806, 0.0
        %vm1029 = vcmp.gt.f32.partialorder %v811, 0.0
        %vm1030 = vcmp.gt.f32.partialorder %v814, 0.0
        %vm1031 = vcmp.gt.f32.partialorder %v819, 0.0
        %vm1032 = vcmp.gt.f32.partialorder %v822, 0.0
        %vm1033 = vcmp.gt.f32.partialorder %v827, 0.0
        %vm1034 = vcmp.gt.f32.partialorder %v830, 0.0
        %vm1035 = vcmp.gt.f32.partialorder %v835, 0.0
        %vm1036 = vcmp.gt.f32.partialorder %v838, 0.0
        %vm1037 = vcmp.gt.f32.partialorder %v843, 0.0
        %vm1038 = vcmp.gt.f32.partialorder %v846, 0.0
        %vm1039 = vcmp.gt.f32.partialorder %v851, 0.0
        %vm1040 = vcmp.gt.f32.partialorder %v854, 0.0
        %vm1041 = vcmp.gt.f32.partialorder %v859, 0.0
        %vm1042 = vcmp.gt.f32.partialorder %v862, 0.0
        %vm1043 = vcmp.gt.f32.partialorder %v867, 0.0
        %vm1044 = vcmp.gt.f32.partialorder %v870, 0.0
        %vm1045 = vcmp.gt.f32.partialorder %v875, 0.0
        %vm1046 = vcmp.gt.f32.partialorder %v878, 0.0
        %vm1047 = vcmp.gt.f32.partialorder %v883, 0.0
        %vm1048 = vcmp.gt.f32.partialorder %v886, 0.0
        %vm1049 = vcmp.gt.f32.partialorder %v891, 0.0
        %vm1050 = vcmp.gt.f32.partialorder %v894, 0.0
        %vm1051 = vcmp.gt.f32.partialorder %v899, 0.0
        %vm1052 = vcmp.gt.f32.partialorder %v902, 0.0
        %vm1053 = vcmp.gt.f32.partialorder %v907, 0.0
        %vm1054 = vcmp.gt.f32.partialorder %v910, 0.0
        %vm1055 = vcmp.gt.f32.partialorder %v915, 0.0
        %vm1056 = vcmp.gt.f32.partialorder %v918, 0.0
        %vm1057 = vcmp.gt.f32.partialorder %v923, 0.0
        %vm1058 = vcmp.gt.f32.partialorder %v926, 0.0
        %vm1059 = vcmp.gt.f32.partialorder %v931, 0.0
        %vm1060 = vcmp.gt.f32.partialorder %v934, 0.0
        %vm1061 = vcmp.gt.f32.partialorder %v939, 0.0
        %vm1062 = vcmp.gt.f32.partialorder %v942, 0.0
        %vm1063 = vcmp.gt.f32.partialorder %v947, 0.0
        %vm1064 = vcmp.gt.f32.partialorder %v950, 0.0
        %vm1065 = vcmp.gt.f32.partialorder %v955, 0.0
        %vm1066 = vcmp.gt.f32.partialorder %v958, 0.0
        %vm1067 = vcmp.gt.f32.partialorder %v963, 0.0
        %vm1068 = vcmp.gt.f32.partialorder %v966, 0.0
        %vm1069 = vcmp.gt.f32.partialorder %v971, 0.0
        %vm1070 = vcmp.gt.f32.partialorder %v974, 0.0
        %vm1071 = vcmp.gt.f32.partialorder %v979, 0.0
        %vm1072 = vcmp.gt.f32.partialorder %v982, 0.0
        %vm1073 = vcmp.gt.f32.partialorder %v987, 0.0
        %vm1074 = vcmp.gt.f32.partialorder %v990, 0.0
        %vm1075 = vcmp.gt.f32.partialorder %v995, 0.0
        %vm1076 = vcmp.gt.f32.partialorder %v998, 0.0
        %vm1077 = vcmp.gt.f32.partialorder %v1003, 0.0
        %vm1078 = vcmp.gt.f32.partialorder %v1006, 0.0
        %vm1079 = vcmp.gt.f32.partialorder %v1011, 0.0
        %vm1080 = vcmp.gt.f32.partialorder %v1014, 0.0
        %v1081 = vmul.f32 %v763, 0.2
        %v1082 = vmul.f32 %v766, 0.2
        %v1083 = vmul.f32 %v771, 0.2
        %v1084 = vmul.f32 %v774, 0.2
        %v1085 = vmul.f32 %v779, 0.2
        %v1086 = vmul.f32 %v782, 0.2
        %v1087 = vmul.f32 %v787, 0.2
        %v1088 = vmul.f32 %v790, 0.2
        %v1089 = vmul.f32 %v795, 0.2
        %v1090 = vmul.f32 %v798, 0.2
        %v1091 = vmul.f32 %v803, 0.2
        %v1092 = vmul.f32 %v806, 0.2
        %v1093 = vmul.f32 %v811, 0.2
        %v1094 = vmul.f32 %v814, 0.2
        %v1095 = vmul.f32 %v819, 0.2
        %v1096 = vmul.f32 %v822, 0.2
        %v1097 = vmul.f32 %v827, 0.2
        %v1098 = vmul.f32 %v830, 0.2
        %v1099 = vmul.f32 %v835, 0.2
        %v1100 = vmul.f32 %v838, 0.2
        %v1101 = vmul.f32 %v843, 0.2
        %v1102 = vmul.f32 %v846, 0.2
        %v1103 = vmul.f32 %v851, 0.2
        %v1104 = vmul.f32 %v854, 0.2
        %v1105 = vmul.f32 %v859, 0.2
        %v1106 = vmul.f32 %v862, 0.2
        %v1107 = vmul.f32 %v867, 0.2
        %v1108 = vmul.f32 %v870, 0.2
        %v1109 = vmul.f32 %v875, 0.2
        %v1110 = vmul.f32 %v878, 0.2
        %v1111 = vmul.f32 %v883, 0.2
        %v1112 = vmul.f32 %v886, 0.2
        %v1113 = vmul.f32 %v891, 0.2
        %v1114 = vmul.f32 %v894, 0.2
        %v1115 = vmul.f32 %v899, 0.2
        %v1116 = vmul.f32 %v902, 0.2
        %v1117 = vmul.f32 %v907, 0.2
        %v1118 = vmul.f32 %v910, 0.2
        %v1119 = vmul.f32 %v915, 0.2
        %v1120 = vmul.f32 %v918, 0.2
        %v1121 = vmul.f32 %v923, 0.2
        %v1122 = vmul.f32 %v926, 0.2
        %v1123 = vmul.f32 %v931, 0.2
        %v1124 = vmul.f32 %v934, 0.2
        %v1125 = vmul.f32 %v939, 0.2
        %v1126 = vmul.f32 %v942, 0.2
        %v1127 = vmul.f32 %v947, 0.2
        %v1128 = vmul.f32 %v950, 0.2
        %v1129 = vmul.f32 %v955, 0.2
        %v1130 = vmul.f32 %v958, 0.2
        %v1131 = vmul.f32 %v963, 0.2
        %v1132 = vmul.f32 %v966, 0.2
        %v1133 = vmul.f32 %v971, 0.2
        %v1134 = vmul.f32 %v974, 0.2
        %v1135 = vmul.f32 %v979, 0.2
        %v1136 = vmul.f32 %v982, 0.2
        %v1137 = vmul.f32 %v987, 0.2
        %v1138 = vmul.f32 %v990, 0.2
        %v1139 = vmul.f32 %v995, 0.2
        %v1140 = vmul.f32 %v998, 0.2
        %v1141 = vmul.f32 %v1003, 0.2
        %v1142 = vmul.f32 %v1006, 0.2
        %v1143 = vmul.f32 %v1011, 0.2
        %v1144 = vmul.f32 %v1014, 0.2
        %v1145 = vsel %vm1017, %v763, %v1081
        %v1146 = vsel %vm1018, %v766, %v1082
        %v1147 = vsel %vm1019, %v771, %v1083
        %v1148 = vsel %vm1020, %v774, %v1084
        %v1149 = vsel %vm1021, %v779, %v1085
        %v1150 = vsel %vm1022, %v782, %v1086
        %v1151 = vsel %vm1023, %v787, %v1087
        %v1152 = vsel %vm1024, %v790, %v1088
        %v1153 = vsel %vm1025, %v795, %v1089
        %v1154 = vsel %vm1026, %v798, %v1090
        %v1155 = vsel %vm1027, %v803, %v1091
        %v1156 = vsel %vm1028, %v806, %v1092
        %v1157 = vsel %vm1029, %v811, %v1093
        %v1158 = vsel %vm1030, %v814, %v1094
        %v1159 = vsel %vm1031, %v819, %v1095
        %v1160 = vsel %vm1032, %v822, %v1096
        %v1161 = vsel %vm1033, %v827, %v1097
        %v1162 = vsel %vm1034, %v830, %v1098
        %v1163 = vsel %vm1035, %v835, %v1099
        %v1164 = vsel %vm1036, %v838, %v1100
        %v1165 = vsel %vm1037, %v843, %v1101
        %v1166 = vsel %vm1038, %v846, %v1102
        %v1167 = vsel %vm1039, %v851, %v1103
        %v1168 = vsel %vm1040, %v854, %v1104
        %v1169 = vsel %vm1041, %v859, %v1105
        %v1170 = vsel %vm1042, %v862, %v1106
        %v1171 = vsel %vm1043, %v867, %v1107
        %v1172 = vsel %vm1044, %v870, %v1108
        %v1173 = vsel %vm1045, %v875, %v1109
        %v1174 = vsel %vm1046, %v878, %v1110
        %v1175 = vsel %vm1047, %v883, %v1111
        %v1176 = vsel %vm1048, %v886, %v1112
        %v1177 = vsel %vm1049, %v891, %v1113
        %v1178 = vsel %vm1050, %v894, %v1114
        %v1179 = vsel %vm1051, %v899, %v1115
        %v1180 = vsel %vm1052, %v902, %v1116
        %v1181 = vsel %vm1053, %v907, %v1117
        %v1182 = vsel %vm1054, %v910, %v1118
        %v1183 = vsel %vm1055, %v915, %v1119
        %v1184 = vsel %vm1056, %v918, %v1120
        %v1185 = vsel %vm1057, %v923, %v1121
        %v1186 = vsel %vm1058, %v926, %v1122
        %v1187 = vsel %vm1059, %v931, %v1123
        %v1188 = vsel %vm1060, %v934, %v1124
        %v1189 = vsel %vm1061, %v939, %v1125
        %v1190 = vsel %vm1062, %v942, %v1126
        %v1191 = vsel %vm1063, %v947, %v1127
        %v1192 = vsel %vm1064, %v950, %v1128
        %v1193 = vsel %vm1065, %v955, %v1129
        %v1194 = vsel %vm1066, %v958, %v1130
        %v1195 = vsel %vm1067, %v963, %v1131
        %v1196 = vsel %vm1068, %v966, %v1132
        %v1197 = vsel %vm1069, %v971, %v1133
        %v1198 = vsel %vm1070, %v974, %v1134
        %v1199 = vsel %vm1071, %v979, %v1135
        %v1200 = vsel %vm1072, %v982, %v1136
        %v1201 = vsel %vm1073, %v987, %v1137
        %v1202 = vsel %vm1074, %v990, %v1138
        %v1203 = vsel %vm1075, %v995, %v1139
        %v1204 = vsel %vm1076, %v998, %v1140
        %v1205 = vsel %vm1077, %v1003, %v1141
        %v1206 = vsel %vm1078, %v1006, %v1142
        %v1207 = vsel %vm1079, %v1011, %v1143
        %v1208 = vsel %vm1080, %v1014, %v1144
        %1209 = vst [vmem:[%s166] sm:$0xff] %v1145
        %1210 = vst [vmem:[%s166 + $0x8] sm:$0xff] %v1146
        %1211 = vst [vmem:[%s166 + $0x10] sm:$0xff] %v1147
        %1212 = vst [vmem:[%s166 + $0x18] sm:$0xff] %v1148
        %1213 = vst [vmem:[%s166 + $0x20] sm:$0xff] %v1149
        %1214 = vst [vmem:[%s166 + $0x28] sm:$0xff] %v1150
        %1215 = vst [vmem:[%s166 + $0x30] sm:$0xff] %v1151
        %1216 = vst [vmem:[%s166 + $0x38] sm:$0xff] %v1152
        %1217 = vst [vmem:[%s166 + $0x40] sm:$0xff] %v1153
        %1218 = vst [vmem:[%s166 + $0x48] sm:$0xff] %v1154
        %1219 = vst [vmem:[%s166 + $0x50] sm:$0xff] %v1155
        %1220 = vst [vmem:[%s166 + $0x58] sm:$0xff] %v1156
        %1221 = vst [vmem:[%s166 + $0x60] sm:$0xff] %v1157
        %1222 = vst [vmem:[%s166 + $0x68] sm:$0xff] %v1158
        %1223 = vst [vmem:[%s166 + $0x70] sm:$0xff] %v1159
        %1224 = vst [vmem:[%s166 + $0x78] sm:$0xff] %v1160
        %1225 = vst [vmem:[%s166 + $0x80] sm:$0xff] %v1161
        %1226 = vst [vmem:[%s166 + $0x88] sm:$0xff] %v1162
        %1227 = vst [vmem:[%s166 + $0x90] sm:$0xff] %v1163
        %1228 = vst [vmem:[%s166 + $0x98] sm:$0xff] %v1164
        %1229 = vst [vmem:[%s166 + $0xa0] sm:$0xff] %v1165
        %1230 = vst [vmem:[%s166 + $0xa8] sm:$0xff] %v1166
        %1231 = vst [vmem:[%s166 + $0xb0] sm:$0xff] %v1167
        %1232 = vst [vmem:[%s166 + $0xb8] sm:$0xff] %v1168
        %1233 = vst [vmem:[%s166 + $0xc0] sm:$0xff] %v1169
        %1234 = vst [vmem:[%s166 + $0xc8] sm:$0xff] %v1170
        %1235 = vst [vmem:[%s166 + $0xd0] sm:$0xff] %v1171
        %1236 = vst [vmem:[%s166 + $0xd8] sm:$0xff] %v1172
        %1237 = vst [vmem:[%s166 + $0xe0] sm:$0xff] %v1173
        %1238 = vst [vmem:[%s166 + $0xe8] sm:$0xff] %v1174
        %1239 = vst [vmem:[%s166 + $0xf0] sm:$0xff] %v1175
        %1240 = vst [vmem:[%s166 + $0xf8] sm:$0xff] %v1176
        %1241 = vst [vmem:[%s166 + $0x100] sm:$0xff] %v1177
        %1242 = vst [vmem:[%s166 + $0x108] sm:$0xff] %v1178
        %1243 = vst [vmem:[%s166 + $0x110] sm:$0xff] %v1179
        %1244 = vst [vmem:[%s166 + $0x118] sm:$0xff] %v1180
        %1245 = vst [vmem:[%s166 + $0x120] sm:$0xff] %v1181
        %1246 = vst [vmem:[%s166 + $0x128] sm:$0xff] %v1182
        %1247 = vst [vmem:[%s166 + $0x130] sm:$0xff] %v1183
        %1248 = vst [vmem:[%s166 + $0x138] sm:$0xff] %v1184
        %1249 = vst [vmem:[%s166 + $0x140] sm:$0xff] %v1185
        %1250 = vst [vmem:[%s166 + $0x148] sm:$0xff] %v1186
        %1251 = vst [vmem:[%s166 + $0x150] sm:$0xff] %v1187
        %1252 = vst [vmem:[%s166 + $0x158] sm:$0xff] %v1188
        %1253 = vst [vmem:[%s166 + $0x160] sm:$0xff] %v1189
        %1254 = vst [vmem:[%s166 + $0x168] sm:$0xff] %v1190
        %1255 = vst [vmem:[%s166 + $0x170] sm:$0xff] %v1191
        %1256 = vst [vmem:[%s166 + $0x178] sm:$0xff] %v1192
        %1257 = vst [vmem:[%s166 + $0x180] sm:$0xff] %v1193
        %1258 = vst [vmem:[%s166 + $0x188] sm:$0xff] %v1194
        %1259 = vst [vmem:[%s166 + $0x190] sm:$0xff] %v1195
        %1260 = vst [vmem:[%s166 + $0x198] sm:$0xff] %v1196
        %1261 = vst [vmem:[%s166 + $0x1a0] sm:$0xff] %v1197
        %1262 = vst [vmem:[%s166 + $0x1a8] sm:$0xff] %v1198
        %1263 = vst [vmem:[%s166 + $0x1b0] sm:$0xff] %v1199
        %1264 = vst [vmem:[%s166 + $0x1b8] sm:$0xff] %v1200
        %1265 = vst [vmem:[%s166 + $0x1c0] sm:$0xff] %v1201
        %1266 = vst [vmem:[%s166 + $0x1c8] sm:$0xff] %v1202
        %1267 = vst [vmem:[%s166 + $0x1d0] sm:$0xff] %v1203
        %1268 = vst [vmem:[%s166 + $0x1d8] sm:$0xff] %v1204
        %1269 = vst [vmem:[%s166 + $0x1e0] sm:$0xff] %v1205
        %1270 = vst [vmem:[%s166 + $0x1e8] sm:$0xff] %v1206
        %1271 = vst [vmem:[%s166 + $0x1f0] sm:$0xff] %v1207
        %1272 = vst [vmem:[%s166 + $0x1f8] sm:$0xff] %v1208
        %s1273 = sand.u32 %s93, 1
        %s1274 = scalar_lea.sflag [#allocation3], %s1273
        %s1275 = sand.u32 %s93, 1
        %s1276 = smul.addr %s1275, 512
        %s1277 = scalar_lea.vmem [#allocation2], %s1276
        // Predicated region
        $region33: #{tpu_custom_call.1} parent=31 // pred_check
          %p1278 = pneg %p103
        $region34: #{tpu_custom_call.1} parent=31 // pred_check_branch
          %1280 = sbr.rel (%p1278) target = $region36
        $region35: #{tpu_custom_call.1} parent=31 // pred_region
          %s1281 = smul.u32 64, %s17
          %s1283 = ssub.s32 8192, 8192
          %1284 = vsyncadd %s1274, %s1283
          %s1285 = smul.addr %s1281, 128
          %s1286 = scalar_lea.hbm %s3, %s1285
          %s1287 = sshll.u32 %s1277, 4
          %s1288 = int_to_ptr.vmem [resolvable:$true] %s1287
          %1293 = dma.vmem_to_hbm [thread:$0]  %s1288, 8192, %s1286, %s1274, 128, 128, 8
        $region36: #{tpu_custom_call.1} parent=31 // pred_fallthru
          _
      $region32: #{tpu_custom_call.1} parent=5 // pred_fallthru
        _
      %p1294 = scmp.le.s32.totalorder 2, %s12
      // Predicated region
      $region37: #{tpu_custom_call.1} parent=5 // pred_check
        %p1295 = pneg %p1294
      $region38: #{tpu_custom_call.1} parent=5 // pred_check_branch
        %1297 = sbr.rel (%p1295) target = $region40
      $region39: #{tpu_custom_call.1} parent=5 // pred_region
        %s1298 = ssub.s32 %s12, 2
        // Predicated region
        $region41: #{tpu_custom_call.1} parent=39 // pred_check
          %p1299 = pneg %p109
        $region42: #{tpu_custom_call.1} parent=39 // pred_check_branch
          %1301 = sbr.rel (%p1299) target = $region44
        $region43: #{tpu_custom_call.1} parent=39 // pred_region
          %s1302 = sand.u32 %s94, 1
          %s1303 = scalar_lea.sflag [#allocation3], %s1302
          %s1304 = sand.u32 %s94, 1
          %s1305 = smul.addr %s1304, 512
          %s1306 = scalar_lea.vmem [#allocation2], %s1305
          %1307 = dma.done %s1303, 8192
        $region44: #{tpu_custom_call.1} parent=39 // pred_fallthru
          _
      $region40: #{tpu_custom_call.1} parent=5 // pred_fallthru
        _
    $region6: #{tpu_custom_call.1} parent=1 // loop_footer
      %s16 = sadd.s32 1, %s12
    $region7: #{tpu_custom_call.1} parent=1 // loop_footer_branch
      %11 = sbr.rel target = $region3
    $region8: #{tpu_custom_call.1} parent=1 // loop_exit
      _
    %1308 = vsyncpa [#allocation3], 1
    %s1309 = scalar_lea.sflag [#allocation3], 1
    %1310 = vsyncpa %s1309, 1

</llo_original>
